<compile_context>
chip_gen: v6e
topology: v6e:2x2x1
jax: 0.10.0
libtpu: 0.0.40
codegen_flags: <defaults>
</compile_context>

<pallas_src>
import jax
import jax.numpy as jnp
from jax.experimental import pallas as pl
from jax.experimental.pallas import tpu as pltpu

# Small, forward-consistent shapes (stand-ins for 768 / 2048 of the real model)
B = 2          # batch
S = 8          # sequence length
H = 32         # "bert hidden size"
IMG_DIM = 128  # stands in for 2048 * 1
PROJ = 64      # stands in for 768 (projection output)
C = 4          # n_classes

LANE = 128     # TPU lane width
B_BLK_PREF = 8     # preferred batch rows per grid step (raise to 16-32 in bf16 on v6e)
S_BLK_PREF = 128   # preferred sequence rows per grid step (real model: S=512 -> 4 steps)


def _round_up(x, m):
    return ((x + m - 1) // m) * m


def _pick_block(n, pref):
    # Use the preferred block if it divides n, otherwise take the whole axis
    # in one block (block_shape == full dim is always legal) — never pad/copy.
    return pref if n % pref == 0 else n


# --------------------------------------------------------------------------
# One-time parameter fusion (call at model-load time, NOT per forward).
# --------------------------------------------------------------------------
def fuse_classifier_params(w_proj, b_proj, w_out, b_out, *, seq_len, hidden,
                           lane=LANE):
    h = hidden
    c = w_out.shape[-1]
    c_pad = _round_up(c, lane)

    w_pool = w_out[:h, :] / jnp.float32(seq_len)               # [H, C] (1/S folded)
    w_img = (w_proj.astype(jnp.float32)
             @ w_out[h:, :].astype(jnp.float32))               # [IMG_DIM, C] f32 math
    b_fused = b_proj.astype(jnp.float32) @ w_out[h:, :].astype(jnp.float32) + b_out

    # Pad classes to a full lane (128) once, so the kernel store is unmasked.
    w_pool_p = jnp.zeros((h, c_pad), jnp.float32).at[:, :c].set(w_pool)
    w_img_p = jnp.zeros((w_img.shape[0], c_pad), jnp.float32).at[:, :c].set(w_img)
    b_p = jnp.zeros((1, c_pad), jnp.float32).at[:, :c].set(b_fused)

    return {"w_pool": w_pool_p, "w_img": w_img_p, "bias": b_p, "n_classes": c}


# --------------------------------------------------------------------------
# Kernel: grid = (batch blocks ["parallel"], seq blocks ["arbitrary"]).
# The f32 output block is the accumulator (its index ignores the seq axis).
# --------------------------------------------------------------------------
def bert_head_kernel(h0_ref, hlast_ref, img_ref,
                     w_pool_ref, w_img_ref, b_ref, out_ref):
    k = pl.program_id(1)

    @pl.when(k == 0)
    def _init():
        # Bias folded into the accumulator init (no epilogue add).
        out_ref[...] = jnp.broadcast_to(b_ref[...], out_ref.shape)

    # Partial mean-pool over this sequence tile; 1/S already folded into w_pool.
    # Upcast bf16 -> f32 BEFORE adding/reducing: exact, and keeps the VPU add
    # valid on v5e (no bf16 VALUs).
    pooled = jnp.sum(h0_ref[...].astype(jnp.float32)
                     + hlast_ref[...].astype(jnp.float32), axis=1)     # [B_BLK, H]
    out_ref[...] += jnp.dot(pooled, w_pool_ref[...],
                            preferred_element_type=jnp.float32)

    @pl.when(k == pl.num_programs(1) - 1)
    def _finalize():
        # dropout(p=0.3) is identity at inference; projection is fused in w_img.
        out_ref[...] += jnp.dot(img_ref[...].astype(jnp.float32),
                                w_img_ref[...],
                                preferred_element_type=jnp.float32)


def bert_classifier_head(h0, hlast, image, fused, *,
                         b_blk=B_BLK_PREF, s_blk=S_BLK_PREF):
    b, s, h = h0.shape
    img_dim = image.shape[-1]
    w_pool, w_img, bias = fused["w_pool"], fused["w_img"], fused["bias"]
    c_pad = w_pool.shape[-1]
    c = fused["n_classes"]

    # No activation padding copies: shrink blocks to the real dims if needed.
    b_blk = _pick_block(b, b_blk)
    s_blk = _pick_block(s, s_blk)
    grid = (b // b_blk, s // s_blk)

    # Explicit scoped-VMEM budget from the actual block footprint
    # (double-buffered inputs + resident weights + output), capped at v7x's
    # 64 MiB physical VMEM so the same setting is safe on v5e/v6e/v7x.
    act_bytes = h0.dtype.itemsize
    vmem_est = (2 * 2 * b_blk * s_blk * h * act_bytes       # h0 + hlast, 2 bufs
                + 2 * b_blk * img_dim * act_bytes           # image, 2 bufs
                + 2 * (h + img_dim + 1) * c_pad * 4         # weights + bias
                + 2 * b_blk * c_pad * 4)                    # output block
    vmem_limit = int(min(max(2 * vmem_est, 8 << 20), 64 << 20))

    out = pl.pallas_call(
        bert_head_kernel,
        out_shape=jax.ShapeDtypeStruct((b, c_pad), jnp.float32),
        grid=grid,
        in_specs=[
            pl.BlockSpec((b_blk, s_blk, h), lambda i, k: (i, k, 0)),   # h0
            pl.BlockSpec((b_blk, s_blk, h), lambda i, k: (i, k, 0)),   # hlast
            pl.BlockSpec((b_blk, img_dim), lambda i, k: (i, 0)),       # image
            pl.BlockSpec((h, c_pad), lambda i, k: (0, 0)),             # W_pool
            pl.BlockSpec((img_dim, c_pad), lambda i, k: (0, 0)),       # W_img (fused)
            pl.BlockSpec((1, c_pad), lambda i, k: (0, 0)),             # bias (fused)
        ],
        out_specs=pl.BlockSpec((b_blk, c_pad), lambda i, k: (i, 0)),
        compiler_params=pltpu.CompilerParams(
            # batch axis shards across v7x's 2 TCs once it has >=2 steps;
            # seq axis is a reduction -> "arbitrary".
            dimension_semantics=("parallel", "arbitrary"),
            vmem_limit_bytes=vmem_limit),
    )(h0, hlast, image, w_pool, w_img, bias)

    return out[:, :c]


# --------------------------------------------------------------------------
# Pure-JAX reference (mirrors the PyTorch forward, f32).
# --------------------------------------------------------------------------
def reference(h0, hlast, image, w_proj, b_proj, w_out, b_out):
    pooled = jnp.mean(h0, axis=1) + jnp.mean(hlast, axis=1)
    img_feat = image @ w_proj + b_proj
    concat = jnp.concatenate([pooled, img_feat.reshape(-1, PROJ)], axis=-1)
    return concat @ w_out + b_out


if __name__ == "__main__":
    key = jax.random.PRNGKey(0)
    k_h0, k_hl, k_img, k_wp, k_bp, k_wo, k_bo = jax.random.split(key, 7)

    # "BERT" hidden states the forward consumes (synthetic; checkpoint not loaded)
    h0_f32 = jax.random.normal(k_h0, (B, S, H), dtype=jnp.float32)
    hlast_f32 = jax.random.normal(k_hl, (B, S, H), dtype=jnp.float32)
    image_f32 = jax.random.normal(k_img, (B, IMG_DIM), dtype=jnp.float32)

    # Deterministic parameter init (uniform, nn.Linear-style bounds)
    wp_bound = 1.0 / (IMG_DIM ** 0.5)
    wo_bound = 1.0 / ((H + PROJ) ** 0.5)
    w_proj = jax.random.uniform(k_wp, (IMG_DIM, PROJ), jnp.float32,
                                -wp_bound, wp_bound)
    b_proj = jax.random.uniform(k_bp, (1, PROJ), jnp.float32,
                                -wp_bound, wp_bound)
    w_out = jax.random.uniform(k_wo, (H + PROJ, C), jnp.float32,
                               -wo_bound, wo_bound)
    b_out = jax.random.uniform(k_bo, (1, C), jnp.float32,
                               -wo_bound, wo_bound)

    # One-time fusion + padding (model-load time, reused every forward).
    fused = jax.tree.map(jax.block_until_ready,
                         fuse_classifier_params(w_proj, b_proj, w_out, b_out,
                                                seq_len=S, hidden=H))

    # Activations are streamed in bf16 (halved HBM bytes); accumulation is f32.
    h0 = h0_f32.astype(jnp.bfloat16)
    hlast = hlast_f32.astype(jnp.bfloat16)
    image = image_f32.astype(jnp.bfloat16)

    out = bert_classifier_head(h0, hlast, image, fused)
    out = jax.block_until_ready(out)

    # Reference sees the same bf16-quantized activations (upcast exactly to f32),
    # so the comparison isolates kernel math from input quantization.
    ref = reference(h0.astype(jnp.float32), hlast.astype(jnp.float32),
                    image.astype(jnp.float32), w_proj, b_proj, w_out, b_out)

    assert out.shape == (B, C) and out.dtype == jnp.float32
    assert jnp.allclose(out, ref, atol=1e-4, rtol=1e-4), "mismatch vs reference"

    print("KERNEL_OK")
</pallas_src>

<mosaic_0001>
module attributes {stable_mosaic.version = 11 : i64} {
  func.func @bert_head_kernel(%arg0: i32, %arg1: i32, %arg2: memref<2x8x32xbf16, #tpu.memory_space<vmem>>, %arg3: memref<2x8x32xbf16, #tpu.memory_space<vmem>>, %arg4: memref<2x128xbf16, #tpu.memory_space<vmem>>, %arg5: memref<32x128xf32, #tpu.memory_space<vmem>>, %arg6: memref<128x128xf32, #tpu.memory_space<vmem>>, %arg7: memref<1x128xf32, #tpu.memory_space<vmem>>, %arg8: memref<2x128xf32, #tpu.memory_space<vmem>>) attributes {dimension_semantics = [#tpu.dimension_semantics<parallel>, #tpu.dimension_semantics<arbitrary>], iteration_bounds = array<i64: 1, 1>, scalar_prefetch = 0 : i64, scratch_operands = 0 : i64, tpu.core_type = #tpu.core_type<tc>, window_params = [{transform_indices = @transform_0, window_bounds = array<i64: 2, 8, 32>}, {transform_indices = @transform_1, window_bounds = array<i64: 2, 8, 32>}, {transform_indices = @transform_2, window_bounds = array<i64: 2, 128>}, {pipeline_mode = #tpu.pipeline_mode<synchronous>, transform_indices = @transform_3, window_bounds = array<i64: 32, 128>}, {pipeline_mode = #tpu.pipeline_mode<synchronous>, transform_indices = @transform_4, window_bounds = array<i64: 128, 128>}, {pipeline_mode = #tpu.pipeline_mode<synchronous>, transform_indices = @transform_5, window_bounds = array<i64: 1, 128>}, {transform_indices = @transform_6, window_bounds = array<i64: 2, 128>}]} {
    %c0_i32 = arith.constant 0 : i32
    %0 = arith.cmpi eq, %arg1, %c0_i32 : i32
    %1 = arith.extui %0 : i1 to i32
    %c0_i32_0 = arith.constant 0 : i32
    %2 = arith.cmpi ne, %1, %c0_i32_0 : i32
    scf.if %2 {
      %c0_15 = arith.constant 0 : index
      %c0_16 = arith.constant 0 : index
      %17 = vector.load %arg7[%c0_15, %c0_16] : memref<1x128xf32, #tpu.memory_space<vmem>>, vector<1x128xf32>
      %18 = vector.shape_cast %17 : vector<1x128xf32> to vector<1x128xf32>
      %19 = vector.broadcast %18 : vector<1x128xf32> to vector<2x128xf32>
      %c0_17 = arith.constant 0 : index
      %c0_18 = arith.constant 0 : index
      %20 = vector.load %arg8[%c0_17, %c0_18] : memref<2x128xf32, #tpu.memory_space<vmem>>, vector<2x128xf32>
      tpu.vector_store %arg8[%c0_17, %c0_18], %19 {strides = array<i32>} : memref<2x128xf32, #tpu.memory_space<vmem>>, vector<2x128xf32>,
    } else {
    }
    %c0 = arith.constant 0 : index
    %c0_1 = arith.constant 0 : index
    %c0_2 = arith.constant 0 : index
    %3 = vector.load %arg2[%c0, %c0_1, %c0_2] : memref<2x8x32xbf16, #tpu.memory_space<vmem>>, vector<2x8x32xbf16>
    %4 = arith.extf %3 : vector<2x8x32xbf16> to vector<2x8x32xf32>
    %c0_3 = arith.constant 0 : index
    %c0_4 = arith.constant 0 : index
    %c0_5 = arith.constant 0 : index
    %5 = vector.load %arg3[%c0_3, %c0_4, %c0_5] : memref<2x8x32xbf16, #tpu.memory_space<vmem>>, vector<2x8x32xbf16>
    %6 = arith.extf %5 : vector<2x8x32xbf16> to vector<2x8x32xf32>
    %7 = arith.addf %4, %6 : vector<2x8x32xf32>
    %cst = arith.constant dense<0.000000e+00> : vector<2x32xf32>
    %8 = vector.multi_reduction <add>, %7, %cst [1] : vector<2x8x32xf32> to vector<2x32xf32>
    %c0_6 = arith.constant 0 : index
    %c0_7 = arith.constant 0 : index
    %9 = vector.load %arg8[%c0_6, %c0_7] : memref<2x128xf32, #tpu.memory_space<vmem>>, vector<2x128xf32>
    %c0_8 = arith.constant 0 : index
    %c0_9 = arith.constant 0 : index
    %10 = vector.load %arg5[%c0_8, %c0_9] : memref<32x128xf32, #tpu.memory_space<vmem>>, vector<32x128xf32>
    %cst_10 = arith.constant dense<0.000000e+00> : vector<2x128xf32>
    %11 = tpu.matmul %8, %10, %cst_10 {dimension_numbers = #tpu.dot_dimension_numbers<[1], [0], [0], [1], [0, 0, 1, 1], [], []>} : vector<2x32xf32>, vector<32x128xf32>, vector<2x128xf32> -> vector<2x128xf32>
    %12 = arith.addf %9, %11 : vector<2x128xf32>
    %c0_11 = arith.constant 0 : index
    %c0_12 = arith.constant 0 : index
    %13 = vector.load %arg8[%c0_11, %c0_12] : memref<2x128xf32, #tpu.memory_space<vmem>>, vector<2x128xf32>
    tpu.vector_store %arg8[%c0_11, %c0_12], %12 {strides = array<i32>} : memref<2x128xf32, #tpu.memory_space<vmem>>, vector<2x128xf32>,
    %c0_i32_13 = arith.constant 0 : i32
    %14 = arith.cmpi eq, %arg1, %c0_i32_13 : i32
    %15 = arith.extui %14 : i1 to i32
    %c0_i32_14 = arith.constant 0 : i32
    %16 = arith.cmpi ne, %15, %c0_i32_14 : i32
    scf.if %16 {
      %c0_15 = arith.constant 0 : index
      %c0_16 = arith.constant 0 : index
      %17 = vector.load %arg8[%c0_15, %c0_16] : memref<2x128xf32, #tpu.memory_space<vmem>>, vector<2x128xf32>
      %c0_17 = arith.constant 0 : index
      %c0_18 = arith.constant 0 : index
      %18 = vector.load %arg4[%c0_17, %c0_18] : memref<2x128xbf16, #tpu.memory_space<vmem>>, vector<2x128xbf16>
      %19 = arith.extf %18 : vector<2x128xbf16> to vector<2x128xf32>
      %c0_19 = arith.constant 0 : index
      %c0_20 = arith.constant 0 : index
      %20 = vector.load %arg6[%c0_19, %c0_20] : memref<128x128xf32, #tpu.memory_space<vmem>>, vector<128x128xf32>
      %cst_21 = arith.constant dense<0.000000e+00> : vector<2x128xf32>
      %21 = tpu.matmul %19, %20, %cst_21 {dimension_numbers = #tpu.dot_dimension_numbers<[1], [0], [0], [1], [0, 0, 1, 1], [], []>} : vector<2x128xf32>, vector<128x128xf32>, vector<2x128xf32> -> vector<2x128xf32>
      %22 = arith.addf %17, %21 : vector<2x128xf32>
      %c0_22 = arith.constant 0 : index
      %c0_23 = arith.constant 0 : index
      %23 = vector.load %arg8[%c0_22, %c0_23] : memref<2x128xf32, #tpu.memory_space<vmem>>, vector<2x128xf32>
      tpu.vector_store %arg8[%c0_22, %c0_23], %22 {strides = array<i32>} : memref<2x128xf32, #tpu.memory_space<vmem>>, vector<2x128xf32>,
    } else {
    }
    return
  }
  func.func @transform_0(%arg0: i32, %arg1: i32) -> (i32, i32, i32) {
    %c0_i32 = arith.constant 0 : i32
    %c0_i32_0 = arith.constant 0 : i32
    return %arg0, %arg1, %c0_i32 : i32, i32, i32
  }
  func.func @transform_1(%arg0: i32, %arg1: i32) -> (i32, i32, i32) {
    %c0_i32 = arith.constant 0 : i32
    %c0_i32_0 = arith.constant 0 : i32
    return %arg0, %arg1, %c0_i32 : i32, i32, i32
  }
  func.func @transform_2(%arg0: i32, %arg1: i32) -> (i32, i32) {
    %c0_i32 = arith.constant 0 : i32
    %c0_i32_0 = arith.constant 0 : i32
    return %arg0, %c0_i32 : i32, i32
  }
  func.func @transform_3(%arg0: i32, %arg1: i32) -> (i32, i32) {
    %c0_i32 = arith.constant 0 : i32
    %c0_i32_0 = arith.constant 0 : i32
    %c0_i32_1 = arith.constant 0 : i32
    return %c0_i32, %c0_i32_0 : i32, i32
  }
  func.func @transform_4(%arg0: i32, %arg1: i32) -> (i32, i32) {
    %c0_i32 = arith.constant 0 : i32
    %c0_i32_0 = arith.constant 0 : i32
    %c0_i32_1 = arith.constant 0 : i32
    return %c0_i32, %c0_i32_0 : i32, i32
  }
  func.func @transform_5(%arg0: i32, %arg1: i32) -> (i32, i32) {
    %c0_i32 = arith.constant 0 : i32
    %c0_i32_0 = arith.constant 0 : i32
    %c0_i32_1 = arith.constant 0 : i32
    return %c0_i32, %c0_i32_0 : i32, i32
  }
  func.func @transform_6(%arg0: i32, %arg1: i32) -> (i32, i32) {
    %c0_i32 = arith.constant 0 : i32
    %c0_i32_0 = arith.constant 0 : i32
    return %arg0, %c0_i32 : i32, i32
  }
}

</mosaic_0001>

<llo_original>
// kernel: tpu_custom_call.1
$region0: #{tpu_custom_call.1}
  #allocation0 [shape = 'u32[]', space=smem, size = 0x4, offset = 0x4, fixed_abs, tag = 'smem constant byte address 0x4 - core index']
  #allocation1 [shape = 'u32[144,128]{1,0:T(1,128)}', space=vmem, size = 0x12000, scoped, tag = 'internal scratch']
  %s0 = inlined_call_operand.hbm [shape: bf16[2,8,32], index: 0, kind: input, shape index: {}]
  %s1 = inlined_call_operand.hbm [shape: bf16[2,8,32], index: 1, kind: input, shape index: {}]
  %s2 = inlined_call_operand.vmem [shape: bf16[2,128], index: 2, kind: input, shape index: {}]
  %s3 = inlined_call_operand.hbm [shape: f32[32,128], index: 3, kind: input, shape index: {}]
  %s4 = inlined_call_operand.hbm [shape: f32[128,128], index: 4, kind: input, shape index: {}]
  %s5 = inlined_call_operand.vmem [shape: f32[1,128], index: 5, kind: input, shape index: {}]
  %s6 = inlined_call_operand.hbm [shape: f32[2,128], index: 6, kind: output, shape index: {}]
  %s7 = sld [smem:[#allocation0]]
  $region58: #{tpu_custom_call.1} parent=0
    _
  %s9 = ssub.s32 1, %s7
  %s10 = scalar_select 0, %s9, %s7
  $region1: #{tpu_custom_call.1} parent=0
    #allocation2 [shape = 'u8[4096]{0}', space=vmem, size = 0x1000, scoped, tag = 'input window, operand 0, single buffered']
    #allocation3 [shape = 's32[1]{0}', space=sflag, size = 0x4, scoped, tag = 'scoped memory for tpu_custom_call.1']
    #allocation4 [shape = 's32[1]{0}', space=sflag, size = 0x4, scoped, tag = 'scoped memory for tpu_custom_call.1']
    #allocation5 [shape = 'u8[4096]{0}', space=vmem, size = 0x1000, scoped, tag = 'input window, operand 1, single buffered']
    #allocation6 [shape = 's32[1]{0}', space=sflag, size = 0x4, scoped, tag = 'scoped memory for tpu_custom_call.1']
    #allocation7 [shape = 'u8[16384]{0}', space=vmem, size = 0x4000, scoped, tag = 'input window, operand 3, single buffered']
    #allocation8 [shape = 'u8[65536]{0}', space=vmem, size = 0x10000, scoped, tag = 'input window, operand 4, single buffered']
    #allocation9 [shape = 's32[1]{0}', space=sflag, size = 0x4, scoped, tag = 'scoped memory for tpu_custom_call.1']
    #allocation10 [shape = 'u8[1024]{0}', space=vmem, size = 0x400, scoped, tag = 'output window, operand 0, single buffered']
    %11 = vsyncpa [#allocation3], 0
    %12 = vsyncpa [#allocation6], 0
    %13 = vsyncpa [#allocation9], 0
    %14 = vsyncpa [#allocation4], 0
    // Predicated region
    $region2: #{tpu_custom_call.1} parent=1 // pred_check
      _
    $region3: #{tpu_custom_call.1} parent=1 // pred_check_branch
      %16 = sbr.rel (0) target = $region5
    $region4: #{tpu_custom_call.1} parent=1 // pred_region
      %s18 = ssub.s32 128, 128
      %19 = vsyncadd [#allocation3], %s18
      %s20 = sshll.u32 [#allocation2], 4
      %s21 = int_to_ptr.vmem [resolvable:$true] %s20
      %26 = dma.hbm_to_vmem [thread:$0]  %s0, 128, %s21, [#allocation3], 64, 64, 4
    $region5: #{tpu_custom_call.1} parent=1 // pred_fallthru
      _
    // Predicated region
    $region6: #{tpu_custom_call.1} parent=1 // pred_check
      _
    $region7: #{tpu_custom_call.1} parent=1 // pred_check_branch
      %28 = sbr.rel (0) target = $region9
    $region8: #{tpu_custom_call.1} parent=1 // pred_region
      %s30 = ssub.s32 128, 128
      %31 = vsyncadd [#allocation6], %s30
      %s32 = sshll.u32 [#allocation5], 4
      %s33 = int_to_ptr.vmem [resolvable:$true] %s32
      %38 = dma.hbm_to_vmem [thread:$0]  %s1, 128, %s33, [#allocation6], 64, 64, 4
    $region9: #{tpu_custom_call.1} parent=1 // pred_fallthru
      _
    // Predicated region
    $region10: #{tpu_custom_call.1} parent=1 // pred_check
      _
    $region11: #{tpu_custom_call.1} parent=1 // pred_check_branch
      %40 = sbr.rel (0) target = $region13
    $region12: #{tpu_custom_call.1} parent=1 // pred_region
      _
    $region13: #{tpu_custom_call.1} parent=1 // pred_fallthru
      _
    // Predicated region
    $region14: #{tpu_custom_call.1} parent=1 // pred_check
      _
    $region15: #{tpu_custom_call.1} parent=1 // pred_check_branch
      %42 = sbr.rel (0) target = $region17
    $region16: #{tpu_custom_call.1} parent=1 // pred_region
      %s44 = ssub.s32 512, 512
      %45 = vsyncadd [#allocation6], %s44
      %s46 = sshll.u32 [#allocation7], 4
      %s47 = int_to_ptr.vmem [resolvable:$true] %s46
      %52 = dma.hbm_to_vmem [thread:$0]  %s3, 512, %s47, [#allocation6], 128, 128, 8
    $region17: #{tpu_custom_call.1} parent=1 // pred_fallthru
      _
    // Predicated region
    $region18: #{tpu_custom_call.1} parent=1 // pred_check
      _
    $region19: #{tpu_custom_call.1} parent=1 // pred_check_branch
      %54 = sbr.rel (0) target = $region21
    $region20: #{tpu_custom_call.1} parent=1 // pred_region
      %s56 = ssub.s32 2048, 2048
      %57 = vsyncadd [#allocation9], %s56
      %s58 = sshll.u32 [#allocation8], 4
      %s59 = int_to_ptr.vmem [resolvable:$true] %s58
      %64 = dma.hbm_to_vmem [thread:$0]  %s4, 2048, %s59, [#allocation9], 128, 128, 8
    $region21: #{tpu_custom_call.1} parent=1 // pred_fallthru
      _
    // Predicated region
    $region22: #{tpu_custom_call.1} parent=1 // pred_check
      _
    $region23: #{tpu_custom_call.1} parent=1 // pred_check_branch
      %66 = sbr.rel (0) target = $region25
    $region24: #{tpu_custom_call.1} parent=1 // pred_region
      _
    $region25: #{tpu_custom_call.1} parent=1 // pred_fallthru
      _
    // Predicated region
    $region26: #{tpu_custom_call.1} parent=1 // pred_check
      _
    $region27: #{tpu_custom_call.1} parent=1 // pred_check_branch
      %68 = sbr.rel (0) target = $region29
    $region28: #{tpu_custom_call.1} parent=1 // pred_region
      %69 = dma.done [#allocation3], 128
    $region29: #{tpu_custom_call.1} parent=1 // pred_fallthru
      _
    // Predicated region
    $region30: #{tpu_custom_call.1} parent=1 // pred_check
      _
    $region31: #{tpu_custom_call.1} parent=1 // pred_check_branch
      %71 = sbr.rel (0) target = $region33
    $region32: #{tpu_custom_call.1} parent=1 // pred_region
      %72 = dma.done [#allocation6], 128
    $region33: #{tpu_custom_call.1} parent=1 // pred_fallthru
      _
    // Predicated region
    $region34: #{tpu_custom_call.1} parent=1 // pred_check
      _
    $region35: #{tpu_custom_call.1} parent=1 // pred_check_branch
      %74 = sbr.rel (0) target = $region37
    $region36: #{tpu_custom_call.1} parent=1 // pred_region
      %75 = dma.done [#allocation6], 512
    $region37: #{tpu_custom_call.1} parent=1 // pred_fallthru
      _
    // Predicated region
    $region38: #{tpu_custom_call.1} parent=1 // pred_check
      _
    $region39: #{tpu_custom_call.1} parent=1 // pred_check_branch
      %77 = sbr.rel (0) target = $region41
    $region40: #{tpu_custom_call.1} parent=1 // pred_region
      %78 = dma.done [#allocation9], 2048
    $region41: #{tpu_custom_call.1} parent=1 // pred_fallthru
      _
    %p79 = scmp.eq.s32.totalorder 0, 0
    // Predicated region
    $region42: #{tpu_custom_call.1} parent=1 // pred_check
      %p80 = pneg %p79
    $region43: #{tpu_custom_call.1} parent=1 // pred_check_branch
      %82 = sbr.rel (%p80) target = $region45
    $region44: #{tpu_custom_call.1} parent=1 // pred_region
      %v83 = vld [vmem:[%s5] sm:$0x1]
      %v85 = vlaneseq
      %v86 = vshrl.u32 %v85, 7
      %v87 = vsub.s32 0, %v86
      %v88 = vrot.slane %v83, %v87
      %90 = vst [vmem:[#allocation10] sm:$0x3] %v88
    $region45: #{tpu_custom_call.1} parent=1 // pred_fallthru
      _
    %v91 = vld [vmem:[#allocation2] sm:$0xf]
    %v92 = vld [vmem:[#allocation2 + $0x4] sm:$0xf]
    %v93 = vunpack.c.l.bf16 %v91
    %v94 = vunpack.c.l.bf16 %v92
    %v95 = vld [vmem:[#allocation5] sm:$0xf]
    %v96 = vld [vmem:[#allocation5 + $0x4] sm:$0xf]
    %v97 = vunpack.c.l.bf16 %v95
    %v98 = vunpack.c.l.bf16 %v96
    %v99 = vadd.f32 %v93, %v97
    %v100 = vadd.f32 %v94, %v98
    %vm101 = vcmask 261120
    %v102 = vsel %vm101, %v99, 0.0
    %v103 = vrot.slane %v102, 4
    %v104 = vadd.f32 %v102, %v103
    %v105 = vrot.slane %v104, 2
    %v106 = vadd.f32 %v104, %v105
    %v107 = vrot.slane %v106, 1
    %v108 = vadd.f32 %v106, %v107
    %v109 = vsel %vm101, %v100, 0.0
    %v110 = vrot.slane %v109, 4
    %v111 = vadd.f32 %v109, %v110
    %v112 = vrot.slane %v111, 2
    %v113 = vadd.f32 %v111, %v112
    %v114 = vrot.slane %v113, 1
    %v115 = vadd.f32 %v113, %v114
    %v116 = vld [vmem:[#allocation10] sm:$0x3]
    %v117 = vld [vmem:[#allocation7] sm:$0xff]
    %v118 = vld [vmem:[#allocation7 + $0x8] sm:$0xff]
    %v119 = vld [vmem:[#allocation7 + $0x10] sm:$0xff]
    %v120 = vld [vmem:[#allocation7 + $0x18] sm:$0xff]
    %vm123 = vcmask 1041409
    %v124 = vsel %vm123, %v115, %v108
    %v125 = vsel %vm101, %v124, 0
    %127 = vmatprep.subr.mxu0 0.0
    %128 = vmatpush1.msra.mxu0 0.0
    %129 = vmatprep.subr.mxu0 0.0
    %130 = vmatpush1.msra.mxu0 0.0
    %131 = vmatprep.subr.mxu0 0.0
    %132 = vmatpush1.msra.mxu0 0.0
    %133 = vmatprep.subr.mxu0 0.0
    %134 = vmatpush1.msra.mxu0 0.0
    %135 = vmatprep.subr.mxu0 0.0
    %136 = vmatpush1.msra.mxu0 0.0
    %137 = vmatprep.subr.mxu0 0.0
    %138 = vmatpush1.msra.mxu0 0.0
    %139 = vmatprep.subr.mxu0 0.0
    %140 = vmatpush1.msra.mxu0 0.0
    %141 = vmatprep.subr.mxu0 0.0
    %142 = vmatpush1.msra.mxu0 0.0
    %143 = vmatprep.subr.mxu0 0.0
    %144 = vmatpush1.msra.mxu0 0.0
    %145 = vmatprep.subr.mxu0 0.0
    %146 = vmatpush1.msra.mxu0 0.0
    %147 = vmatprep.subr.mxu0 0.0
    %148 = vmatpush1.msra.mxu0 0.0
    %149 = vmatprep.subr.mxu0 0.0
    %150 = vmatpush1.msra.mxu0 0.0
    %151 = vmatprep.subr.mxu0 0.0
    %152 = vmatpush1.msra.mxu0 %v120
    %153 = vmatprep.subr.mxu0 0.0
    %154 = vmatpush1.msra.mxu0 %v119
    %155 = vmatprep.subr.mxu0 0.0
    %156 = vmatpush1.msra.mxu0 %v118
    %157 = vmatprep.subr.mxu0 0.0
    %158 = vmatpush1.msra.mxu0 %v117
    %159 = vmatprep.subr.mxu0 0.0
    %160 = vmatpush2.msra.mxu0 0.0
    %161 = vmatprep.subr.mxu0 0.0
    %162 = vmatpush2.msra.mxu0 0.0
    %163 = vmatprep.subr.mxu0 0.0
    %164 = vmatpush2.msra.mxu0 0.0
    %165 = vmatprep.subr.mxu0 0.0
    %166 = vmatpush2.msra.mxu0 0.0
    %167 = vmatprep.subr.mxu0 0.0
    %168 = vmatpush2.msra.mxu0 0.0
    %169 = vmatprep.subr.mxu0 0.0
    %170 = vmatpush2.msra.mxu0 0.0
    %171 = vmatprep.subr.mxu0 0.0
    %172 = vmatpush2.msra.mxu0 0.0
    %173 = vmatprep.subr.mxu0 0.0
    %174 = vmatpush2.msra.mxu0 0.0
    %175 = vmatprep.subr.mxu0 0.0
    %176 = vmatpush2.msra.mxu0 0.0
    %177 = vmatprep.subr.mxu0 0.0
    %178 = vmatpush2.msra.mxu0 0.0
    %179 = vmatprep.subr.mxu0 0.0
    %180 = vmatpush2.msra.mxu0 0.0
    %181 = vmatprep.subr.mxu0 0.0
    %182 = vmatpush2.msra.mxu0 0.0
    %183 = vmatprep.subr.mxu0 0.0
    %184 = vmatpush2.msra.mxu0 0.0
    %185 = vmatprep.subr.mxu0 0.0
    %186 = vmatpush2.msra.mxu0 0.0
    %187 = vmatprep.subr.mxu0 0.0
    %188 = vmatpush2.msra.mxu0 0.0
    %189 = vmatprep.subr.mxu0 0.0
    %190 = vmatpush2.msra.mxu0 0.0
    %191 = vmatprep.mubr.f32.mxu0 0.0
    %192 = vmatmul.mubr.f32.gmra.mxu0 %v125
    %v193 = vpop.f32.mrf.mxu0
    %v194 = vadd.f32 0.0, %v193
    %v195 = vpop.f32.mrf.mxu0
    %196 = vdwg.mxu0
    %v197 = vadd.f32 %v116, %v194
    %198 = vst [vmem:[#allocation10] sm:$0x3] %v197
    // Predicated region
    $region46: #{tpu_custom_call.1} parent=1 // pred_check
      %p199 = pneg %p79
    $region47: #{tpu_custom_call.1} parent=1 // pred_check_branch
      %201 = sbr.rel (%p199) target = $region49
    $region48: #{tpu_custom_call.1} parent=1 // pred_region
      %v202 = vld [vmem:[#allocation10] sm:$0x3]
      %v203 = vld [vmem:[%s2] sm:$0x1]
      %v204 = vunpack.c.l.bf16 %v203
      %v205 = vld [vmem:[#allocation8] sm:$0xff]
      %v206 = vld [vmem:[#allocation8 + $0x8] sm:$0xff]
      %v207 = vld [vmem:[#allocation8 + $0x10] sm:$0xff]
      %v208 = vld [vmem:[#allocation8 + $0x18] sm:$0xff]
      %v209 = vld [vmem:[#allocation8 + $0x20] sm:$0xff]
      %v210 = vld [vmem:[#allocation8 + $0x28] sm:$0xff]
      %v211 = vld [vmem:[#allocation8 + $0x30] sm:$0xff]
      %v212 = vld [vmem:[#allocation8 + $0x38] sm:$0xff]
      %v213 = vld [vmem:[#allocation8 + $0x40] sm:$0xff]
      %v214 = vld [vmem:[#allocation8 + $0x48] sm:$0xff]
      %v215 = vld [vmem:[#allocation8 + $0x50] sm:$0xff]
      %v216 = vld [vmem:[#allocation8 + $0x58] sm:$0xff]
      %v217 = vld [vmem:[#allocation8 + $0x60] sm:$0xff]
      %v218 = vld [vmem:[#allocation8 + $0x68] sm:$0xff]
      %v219 = vld [vmem:[#allocation8 + $0x70] sm:$0xff]
      %v220 = vld [vmem:[#allocation8 + $0x78] sm:$0xff]
      %221 = vmatprep.subr.mxu0 0.0
      %222 = vmatpush1.msra.mxu0 %v220
      %223 = vmatprep.subr.mxu0 0.0
      %224 = vmatpush1.msra.mxu0 %v219
      %225 = vmatprep.subr.mxu0 0.0
      %226 = vmatpush1.msra.mxu0 %v218
      %227 = vmatprep.subr.mxu0 0.0
      %228 = vmatpush1.msra.mxu0 %v217
      %229 = vmatprep.subr.mxu0 0.0
      %230 = vmatpush1.msra.mxu0 %v216
      %231 = vmatprep.subr.mxu0 0.0
      %232 = vmatpush1.msra.mxu0 %v215
      %233 = vmatprep.subr.mxu0 0.0
      %234 = vmatpush1.msra.mxu0 %v214
      %235 = vmatprep.subr.mxu0 0.0
      %236 = vmatpush1.msra.mxu0 %v213
      %237 = vmatprep.subr.mxu0 0.0
      %238 = vmatpush1.msra.mxu0 %v212
      %239 = vmatprep.subr.mxu0 0.0
      %240 = vmatpush1.msra.mxu0 %v211
      %241 = vmatprep.subr.mxu0 0.0
      %242 = vmatpush1.msra.mxu0 %v210
      %243 = vmatprep.subr.mxu0 0.0
      %244 = vmatpush1.msra.mxu0 %v209
      %245 = vmatprep.subr.mxu0 0.0
      %246 = vmatpush1.msra.mxu0 %v208
      %247 = vmatprep.subr.mxu0 0.0
      %248 = vmatpush1.msra.mxu0 %v207
      %249 = vmatprep.subr.mxu0 0.0
      %250 = vmatpush1.msra.mxu0 %v206
      %251 = vmatprep.subr.mxu0 0.0
      %252 = vmatpush1.msra.mxu0 %v205
      %253 = vmatprep.subr.mxu0 0.0
      %254 = vmatpush2.msra.mxu0 0.0
      %255 = vmatprep.subr.mxu0 0.0
      %256 = vmatpush2.msra.mxu0 0.0
      %257 = vmatprep.subr.mxu0 0.0
      %258 = vmatpush2.msra.mxu0 0.0
      %259 = vmatprep.subr.mxu0 0.0
      %260 = vmatpush2.msra.mxu0 0.0
      %261 = vmatprep.subr.mxu0 0.0
      %262 = vmatpush2.msra.mxu0 0.0
      %263 = vmatprep.subr.mxu0 0.0
      %264 = vmatpush2.msra.mxu0 0.0
      %265 = vmatprep.subr.mxu0 0.0
      %266 = vmatpush2.msra.mxu0 0.0
      %267 = vmatprep.subr.mxu0 0.0
      %268 = vmatpush2.msra.mxu0 0.0
      %269 = vmatprep.subr.mxu0 0.0
      %270 = vmatpush2.msra.mxu0 0.0
      %271 = vmatprep.subr.mxu0 0.0
      %272 = vmatpush2.msra.mxu0 0.0
      %273 = vmatprep.subr.mxu0 0.0
      %274 = vmatpush2.msra.mxu0 0.0
      %275 = vmatprep.subr.mxu0 0.0
      %276 = vmatpush2.msra.mxu0 0.0
      %277 = vmatprep.subr.mxu0 0.0
      %278 = vmatpush2.msra.mxu0 0.0
      %279 = vmatprep.subr.mxu0 0.0
      %280 = vmatpush2.msra.mxu0 0.0
      %281 = vmatprep.subr.mxu0 0.0
      %282 = vmatpush2.msra.mxu0 0.0
      %283 = vmatprep.subr.mxu0 0.0
      %284 = vmatpush2.msra.mxu0 0.0
      %285 = vmatprep.mubr.f32.mxu0 0.0
      %286 = vmatmul.mubr.f32.gmra.mxu0 %v204
      %v287 = vpop.f32.mrf.mxu0
      %v288 = vadd.f32 0.0, %v287
      %v289 = vpop.f32.mrf.mxu0
      %290 = vdwg.mxu0
      %v291 = vadd.f32 %v202, %v288
      %292 = vst [vmem:[#allocation10] sm:$0x3] %v291
    $region49: #{tpu_custom_call.1} parent=1 // pred_fallthru
      _
    // Predicated region
    $region50: #{tpu_custom_call.1} parent=1 // pred_check
      _
    $region51: #{tpu_custom_call.1} parent=1 // pred_check_branch
      %294 = sbr.rel (0) target = $region53
    $region52: #{tpu_custom_call.1} parent=1 // pred_region
      %s296 = ssub.s32 32, 32
      %297 = vsyncadd [#allocation4], %s296
      %s299 = sshll.u32 [#allocation10], 4
      %s300 = int_to_ptr.vmem [resolvable:$true] %s299
      %302 = dma.vmem_to_hbm [thread:$0]  %s300, 32, %s6, [#allocation4]
    $region53: #{tpu_custom_call.1} parent=1 // pred_fallthru
      _
    // Predicated region
    $region54: #{tpu_custom_call.1} parent=1 // pred_check
      _
    $region55: #{tpu_custom_call.1} parent=1 // pred_check_branch
      %304 = sbr.rel (0) target = $region57
    $region56: #{tpu_custom_call.1} parent=1 // pred_region
      %305 = dma.done [#allocation4], 32
    $region57: #{tpu_custom_call.1} parent=1 // pred_fallthru
      _
    %306 = vsyncpa [#allocation3], 1
    %307 = vsyncpa [#allocation6], 1
    %308 = vsyncpa [#allocation9], 1
    %309 = vsyncpa [#allocation4], 1

</llo_original>
